<compile_context>
chip_gen: v7x
topology: tpu7x:2x2x1
jax: 0.10.0
libtpu: 0.0.40
codegen_flags: <defaults>
</compile_context>

<pallas_src>
import functools

import jax
import jax.numpy as jnp
from jax import lax
from jax.experimental import pallas as pl
from jax.experimental.pallas import tpu as pltpu
import numpy as np

SLOPE = 0.01  # LeakyReLU negative slope


def _depthconv_kernel(x_ref, w1_ref, b1_ref, slope_ref, dww_ref, dwb_ref,
                      wcat_ref, bcat_ref, row_ref, col_ref, out_ref, *, H, W):
    """Blocks: x_ref (1, Cin, L), out_ref (1, Cout, L), L = imgs_per_step*H*W.
    Channels on sublanes, packed flattened spatial on lanes (lane-dense)."""
    L = x_ref.shape[2]

    x = x_ref[0]                                        # (Cin, L), lane-dense

    # --- conv1 (1x1) fused with an identity pass-through of x ---------------
    # w1_ref = [w1; eye(Cin)], b1_ref = [b1; 0]  ->  z = [conv1_pre(x); x]
    z = jnp.dot(w1_ref[...], x, preferred_element_type=jnp.float32) + b1_ref[...]
    # Per-row LeakyReLU slope: SLOPE on the conv1 rows, 1.0 (identity) on the
    # pass-through rows.  One compare+select at full sublane occupancy.
    z = jnp.where(z >= 0, z, slope_ref[...] * z)        # (C1, L)

    # --- depthwise 3x3, zero padding=1 (identity centre taps on pass-through
    # rows).  Neighbour (h+dy, w+dx) of flat position p is p + dy*W + dx,
    # fetched with an XLU roll; wrap-around across row / image / step edges is
    # killed by the row/col masks (so packing images on lanes stays correct).
    row = row_ref[...]                                  # (1, L) int32: h index
    col = col_ref[...]                                  # (1, L) int32: w index
    dww = dww_ref[...]                                  # (C1, 9), loaded once

    acc = z * dww[:, 4:5]                               # centre tap (dy=0, dx=0)
    for dy in (-1, 0, 1):
        rmask = None
        if dy == -1:
            rmask = row >= 1
        elif dy == 1:
            rmask = row <= H - 2
        for dx in (-1, 0, 1):
            if dy == 0 and dx == 0:
                continue
            cmask = None
            if dx == -1:
                cmask = col >= 1
            elif dx == 1:
                cmask = col <= W - 2
            if rmask is None:
                mask = cmask
            elif cmask is None:
                mask = rmask
            else:
                mask = rmask & cmask
            off = dy * W + dx
            shifted = pltpu.roll(z, (-off) % L, axis=1)   # shifted[p] = z[p + off]
            tap = (dy + 1) * 3 + (dx + 1)
            acc = acc + jnp.where(mask, shifted, 0.0) * dww[:, tap:tap + 1]
    d = acc + dwb_ref[...]                              # (C1, L): [dw(h); x]

    # --- fused conv2 + adaptor: single MXU call, folded bias ----------------
    y = jnp.dot(wcat_ref[...], d, preferred_element_type=jnp.float32) + bcat_ref[...]

    out_ref[0] = y.astype(out_ref.dtype)                # lane-dense, unmasked store


@jax.jit
def depth_conv_forward(x_nchw, params):
    """x_nchw: (N, Cin, H, W) float32 -> (N, Cout, H, W).  Matches
    DepthConv.forward for stride=1, depth_kernel=3, in_ch != out_ch (1x1
    adaptor active)."""
    w1, b1, dww, dwb, w2, b2, wa, ba = (params[k] for k in
                                        ("w1", "b1", "dww", "dwb", "w2", "b2", "wa", "ba"))
    N, Cin, H, W = x_nchw.shape
    Cdw = w1.shape[0]
    Cout = w2.shape[0]
    HW = H * W
    C1 = Cdw + Cin
    f32 = jnp.float32

    # Pack as many whole images per grid step as fit a small VMEM budget: the
    # lane axis of each block becomes imgs*H*W.  Bigger tiles amortize the
    # ~0.35 us/step grid overhead and widen the MXU calls; the depthwise masks
    # make the packing correctness-neutral.  For very large single images,
    # imgs degrades to 1 and the kernel falls back to one image per step.
    budget = 2 << 20                       # ~2 MiB of x+out blocks per step
    imgs = 1
    for cand in range(N, 0, -1):
        if N % cand == 0 and 2 * (Cin + Cout) * cand * HW * 4 <= budget:
            imgs = cand
            break
    steps = N // imgs
    L = imgs * HW

    # Pack: (N,Cin,H,W) -> (steps, Cin, imgs*HW).  When imgs==1 the transpose
    # is over a size-1 axis (free); otherwise it is a tiny copy inside this jit.
    x_packed = (x_nchw.reshape(steps, imgs, Cin, HW)
                .transpose(0, 2, 1, 3)
                .reshape(steps, Cin, L))

    # --- one-time operand prep (XLA-side, same jit) --------------------------
    # conv1 stacked with an identity pass-through of x.
    w1_ext = jnp.concatenate([w1, jnp.eye(Cin, dtype=f32)], axis=0)      # (C1, Cin)
    b1_ext = jnp.concatenate([b1, jnp.zeros((Cin,), f32)]).reshape(C1, 1)
    slope_vec = jnp.concatenate([jnp.full((Cdw,), SLOPE, f32),
                                 jnp.ones((Cin,), f32)]).reshape(C1, 1)
    # Depthwise taps, extended with identity taps for the pass-through rows.
    id_taps = jnp.zeros((Cin, 9), f32).at[:, 4].set(1.0)
    dww_ext = jnp.concatenate([dww.reshape(Cdw, 9), id_taps], axis=0)    # (C1, 9)
    dwb_ext = jnp.concatenate([dwb, jnp.zeros((Cin,), f32)]).reshape(C1, 1)
    # conv2 and adaptor fused along K, biases folded.
    w_cat = jnp.concatenate([w2, wa], axis=1)                            # (Cout, C1)
    b_cat = (b2 + ba).reshape(Cout, 1)
    # Hoisted per-lane spatial indices for the 3x3 boundary masks.
    flat = jnp.arange(L, dtype=jnp.int32)
    row_ids = ((flat % HW) // W).reshape(1, L)
    col_ids = (flat % W).reshape(1, L)

    kernel = functools.partial(_depthconv_kernel, H=H, W=W)

    out_packed = pl.pallas_call(
        kernel,
        out_shape=jax.ShapeDtypeStruct((steps, Cout, L), x_nchw.dtype),
        grid_spec=pltpu.PrefetchScalarGridSpec(
            num_scalar_prefetch=0,
            grid=(steps,),
            in_specs=[
                pl.BlockSpec((1, Cin, L), lambda s: (s, 0, 0)),   # packed x
                pl.BlockSpec((C1, Cin),   lambda s: (0, 0)),      # [w1; I]
                pl.BlockSpec((C1, 1),     lambda s: (0, 0)),      # [b1; 0]
                pl.BlockSpec((C1, 1),     lambda s: (0, 0)),      # per-row slope
                pl.BlockSpec((C1, 9),     lambda s: (0, 0)),      # depthwise taps
                pl.BlockSpec((C1, 1),     lambda s: (0, 0)),      # depthwise bias
                pl.BlockSpec((Cout, C1),  lambda s: (0, 0)),      # [w2 | wa]
                pl.BlockSpec((Cout, 1),   lambda s: (0, 0)),      # b2 + ba
                pl.BlockSpec((1, L),      lambda s: (0, 0)),      # row ids
                pl.BlockSpec((1, L),      lambda s: (0, 0)),      # col ids
            ],
            out_specs=pl.BlockSpec((1, Cout, L), lambda s: (s, 0, 0)),
        ),
        compiler_params=pltpu.CompilerParams(
            dimension_semantics=("parallel",),
            # Per-step footprint is tens of KiB at these shapes; keep the
            # scoped-VMEM cap modest so the same kernel fits comfortably on
            # v5e/v6e (128 MiB) and v7x (64 MiB physical).
            vmem_limit_bytes=16 * 1024 * 1024,
        ),
    )(x_packed, w1_ext, b1_ext, slope_vec, dww_ext, dwb_ext,
      w_cat, b_cat, row_ids, col_ids)

    # Unpack lanes back to NCHW (free reshape when imgs == 1).
    out = (out_packed.reshape(steps, Cout, imgs, HW)
           .transpose(0, 2, 1, 3)
           .reshape(N, Cout, H, W))
    return out


def init_params(key, in_ch, out_ch):
    """Synthetic init matching DepthConv(in_ch, out_ch, depth_kernel=3, stride=1),
    PyTorch-native (squeezed) weight shapes."""
    dw_ch = in_ch
    ks = jax.random.split(key, 8)
    u = lambda k, shp: jax.random.uniform(k, shp, jnp.float32, -0.1, 0.1)
    return dict(
        w1=u(ks[0], (dw_ch, in_ch)),     # conv1 1x1 weight (out, in)
        b1=u(ks[1], (dw_ch,)),
        dww=u(ks[2], (dw_ch, 3, 3)),     # depthwise 3x3 per-channel kernels
        dwb=u(ks[3], (dw_ch,)),
        w2=u(ks[4], (out_ch, dw_ch)),    # conv2 1x1 weight (out, in)
        b2=u(ks[5], (out_ch,)),
        wa=u(ks[6], (out_ch, in_ch)),    # adaptor 1x1 weight (in_ch != out_ch)
        ba=u(ks[7], (out_ch,)),
    )


def ref_forward(x_nchw, params):
    """Pure-JAX reference mirroring the PyTorch forward (stride=1 path)."""
    w1, b1, dww, dwb, w2, b2, wa, ba = (params[k] for k in
                                        ("w1", "b1", "dww", "dwb", "w2", "b2", "wa", "ba"))
    Cdw = w1.shape[0]
    x = jnp.transpose(x_nchw, (0, 2, 3, 1))                        # NHWC
    h = jnp.einsum('nhwc,dc->nhwd', x, w1) + b1
    h = jnp.where(h >= 0, h, SLOPE * h)
    dw_kernel = jnp.transpose(dww, (1, 2, 0))[:, :, None, :]       # (3,3,1,Cdw) HWIO
    d = lax.conv_general_dilated(h, dw_kernel, (1, 1), 'SAME',
                                 dimension_numbers=('NHWC', 'HWIO', 'NHWC'),
                                 feature_group_count=Cdw) + dwb
    y = jnp.einsum('nhwd,od->nhwo', d, w2) + b2
    ident = jnp.einsum('nhwc,oc->nhwo', x, wa) + ba
    return jnp.transpose(y + ident, (0, 3, 1, 2))


if __name__ == "__main__":
    key = jax.random.PRNGKey(0)
    kx, kp = jax.random.split(key)

    N, Cin, H, W = 2, 4, 16, 16
    Cout = 8
    x = jax.random.normal(kx, (N, Cin, H, W), dtype=jnp.float32)
    params = init_params(kp, Cin, Cout)

    out = jax.block_until_ready(depth_conv_forward(x, params))
    ref = jax.block_until_ready(ref_forward(x, params))

    assert out.shape == (N, Cout, H, W)
    np.testing.assert_allclose(np.asarray(out), np.asarray(ref), rtol=1e-5, atol=1e-5)

    print("KERNEL_OK")
</pallas_src>

<mosaic_0001>
module attributes {stable_mosaic.version = 11 : i64} {
  func.func @_depthconv_kernel(%arg0: i32, %arg1: memref<1x4x512xf32, #tpu.memory_space<vmem>>, %arg2: memref<8x4xf32, #tpu.memory_space<vmem>>, %arg3: memref<8x1xf32, #tpu.memory_space<vmem>>, %arg4: memref<8x1xf32, #tpu.memory_space<vmem>>, %arg5: memref<8x9xf32, #tpu.memory_space<vmem>>, %arg6: memref<8x1xf32, #tpu.memory_space<vmem>>, %arg7: memref<8x8xf32, #tpu.memory_space<vmem>>, %arg8: memref<8x1xf32, #tpu.memory_space<vmem>>, %arg9: memref<1x512xi32, #tpu.memory_space<vmem>>, %arg10: memref<1x512xi32, #tpu.memory_space<vmem>>, %arg11: memref<1x8x512xf32, #tpu.memory_space<vmem>>) attributes {dimension_semantics = [#tpu.dimension_semantics<parallel>], iteration_bounds = array<i64: 1>, scalar_prefetch = 0 : i64, scratch_operands = 0 : i64, tpu.core_type = #tpu.core_type<tc>, window_params = [{transform_indices = @transform_0, window_bounds = array<i64: 1, 4, 512>}, {pipeline_mode = #tpu.pipeline_mode<synchronous>, transform_indices = @transform_1, window_bounds = array<i64: 8, 4>}, {pipeline_mode = #tpu.pipeline_mode<synchronous>, transform_indices = @transform_2, window_bounds = array<i64: 8, 1>}, {pipeline_mode = #tpu.pipeline_mode<synchronous>, transform_indices = @transform_3, window_bounds = array<i64: 8, 1>}, {pipeline_mode = #tpu.pipeline_mode<synchronous>, transform_indices = @transform_4, window_bounds = array<i64: 8, 9>}, {pipeline_mode = #tpu.pipeline_mode<synchronous>, transform_indices = @transform_5, window_bounds = array<i64: 8, 1>}, {pipeline_mode = #tpu.pipeline_mode<synchronous>, transform_indices = @transform_6, window_bounds = array<i64: 8, 8>}, {pipeline_mode = #tpu.pipeline_mode<synchronous>, transform_indices = @transform_7, window_bounds = array<i64: 8, 1>}, {pipeline_mode = #tpu.pipeline_mode<synchronous>, transform_indices = @transform_8, window_bounds = array<i64: 1, 512>}, {pipeline_mode = #tpu.pipeline_mode<synchronous>, transform_indices = @transform_9, window_bounds = array<i64: 1, 512>}, {transform_indices = @transform_10, window_bounds = array<i64: 1, 8, 512>}]} {
    %c0 = arith.constant 0 : index
    %c0_0 = arith.constant 0 : index
    %c0_1 = arith.constant 0 : index
    %0 = vector.load %arg1[%c0, %c0_0, %c0_1] : memref<1x4x512xf32, #tpu.memory_space<vmem>>, vector<1x4x512xf32>
    %1 = vector.shape_cast %0 : vector<1x4x512xf32> to vector<4x512xf32>
    %c0_2 = arith.constant 0 : index
    %c0_3 = arith.constant 0 : index
    %2 = vector.load %arg2[%c0_2, %c0_3] : memref<8x4xf32, #tpu.memory_space<vmem>>, vector<8x4xf32>
    %cst = arith.constant dense<0.000000e+00> : vector<8x512xf32>
    %3 = tpu.matmul %2, %1, %cst {dimension_numbers = #tpu.dot_dimension_numbers<[1], [0], [0], [1], [0, 0, 1, 1], [], []>} : vector<8x4xf32>, vector<4x512xf32>, vector<8x512xf32> -> vector<8x512xf32>
    %c0_4 = arith.constant 0 : index
    %c0_5 = arith.constant 0 : index
    %4 = vector.load %arg3[%c0_4, %c0_5] : memref<8x1xf32, #tpu.memory_space<vmem>>, vector<8x1xf32>
    %5 = vector.broadcast %4 : vector<8x1xf32> to vector<8x512xf32>
    %6 = arith.addf %3, %5 : vector<8x512xf32>
    %cst_6 = arith.constant 0.000000e+00 : f32
    %7 = vector.broadcast %cst_6 : f32 to vector<8x512xf32>
    %8 = arith.cmpf oge, %6, %7 : vector<8x512xf32>
    %c0_7 = arith.constant 0 : index
    %c0_8 = arith.constant 0 : index
    %9 = vector.load %arg4[%c0_7, %c0_8] : memref<8x1xf32, #tpu.memory_space<vmem>>, vector<8x1xf32>
    %10 = vector.broadcast %9 : vector<8x1xf32> to vector<8x512xf32>
    %11 = arith.mulf %10, %6 : vector<8x512xf32>
    %12 = arith.select %8, %6, %11 : vector<8x512xi1>, vector<8x512xf32>
    %c0_9 = arith.constant 0 : index
    %c0_10 = arith.constant 0 : index
    %13 = vector.load %arg9[%c0_9, %c0_10] : memref<1x512xi32, #tpu.memory_space<vmem>>, vector<1x512xi32>
    %c0_11 = arith.constant 0 : index
    %c0_12 = arith.constant 0 : index
    %14 = vector.load %arg10[%c0_11, %c0_12] : memref<1x512xi32, #tpu.memory_space<vmem>>, vector<1x512xi32>
    %c0_13 = arith.constant 0 : index
    %c0_14 = arith.constant 0 : index
    %15 = vector.load %arg5[%c0_13, %c0_14] : memref<8x9xf32, #tpu.memory_space<vmem>>, vector<8x9xf32>
    %16 = vector.extract_strided_slice %15 {offsets = [0, 4], sizes = [8, 1], strides = [1, 1]} : vector<8x9xf32> to vector<8x1xf32>
    %17 = vector.broadcast %16 : vector<8x1xf32> to vector<8x512xf32>
    %18 = arith.mulf %12, %17 : vector<8x512xf32>
    %c1_i32 = arith.constant 1 : i32
    %19 = vector.broadcast %c1_i32 : i32 to vector<1x512xi32>
    %20 = arith.cmpi sge, %13, %19 : vector<1x512xi32>
    %c1_i32_15 = arith.constant 1 : i32
    %21 = vector.broadcast %c1_i32_15 : i32 to vector<1x512xi32>
    %22 = arith.cmpi sge, %14, %21 : vector<1x512xi32>
    %23 = arith.andi %20, %22 : vector<1x512xi1>
    %c17_i32 = arith.constant 17 : i32
    %24 = tpu.dynamic_rotate %12 by %c17_i32 dim 1 : vector<8x512xf32>, i32 -> vector<8x512xf32>
    %cst_16 = arith.constant 0.000000e+00 : f32
    %25 = vector.shape_cast %23 : vector<1x512xi1> to vector<1x512xi1>
    %26 = vector.broadcast %25 : vector<1x512xi1> to vector<8x512xi1>
    %27 = vector.broadcast %cst_16 : f32 to vector<8x512xf32>
    %28 = arith.select %26, %24, %27 : vector<8x512xi1>, vector<8x512xf32>
    %29 = vector.extract_strided_slice %15 {offsets = [0, 0], sizes = [8, 1], strides = [1, 1]} : vector<8x9xf32> to vector<8x1xf32>
    %30 = vector.broadcast %29 : vector<8x1xf32> to vector<8x512xf32>
    %31 = arith.mulf %28, %30 : vector<8x512xf32>
    %32 = arith.addf %18, %31 : vector<8x512xf32>
    %c16_i32 = arith.constant 16 : i32
    %33 = tpu.dynamic_rotate %12 by %c16_i32 dim 1 : vector<8x512xf32>, i32 -> vector<8x512xf32>
    %cst_17 = arith.constant 0.000000e+00 : f32
    %34 = vector.shape_cast %20 : vector<1x512xi1> to vector<1x512xi1>
    %35 = vector.broadcast %34 : vector<1x512xi1> to vector<8x512xi1>
    %36 = vector.broadcast %cst_17 : f32 to vector<8x512xf32>
    %37 = arith.select %35, %33, %36 : vector<8x512xi1>, vector<8x512xf32>
    %38 = vector.extract_strided_slice %15 {offsets = [0, 1], sizes = [8, 1], strides = [1, 1]} : vector<8x9xf32> to vector<8x1xf32>
    %39 = vector.broadcast %38 : vector<8x1xf32> to vector<8x512xf32>
    %40 = arith.mulf %37, %39 : vector<8x512xf32>
    %41 = arith.addf %32, %40 : vector<8x512xf32>
    %c14_i32 = arith.constant 14 : i32
    %42 = vector.broadcast %c14_i32 : i32 to vector<1x512xi32>
    %43 = arith.cmpi sle, %14, %42 : vector<1x512xi32>
    %44 = arith.andi %20, %43 : vector<1x512xi1>
    %c15_i32 = arith.constant 15 : i32
    %45 = tpu.dynamic_rotate %12 by %c15_i32 dim 1 : vector<8x512xf32>, i32 -> vector<8x512xf32>
    %cst_18 = arith.constant 0.000000e+00 : f32
    %46 = vector.shape_cast %44 : vector<1x512xi1> to vector<1x512xi1>
    %47 = vector.broadcast %46 : vector<1x512xi1> to vector<8x512xi1>
    %48 = vector.broadcast %cst_18 : f32 to vector<8x512xf32>
    %49 = arith.select %47, %45, %48 : vector<8x512xi1>, vector<8x512xf32>
    %50 = vector.extract_strided_slice %15 {offsets = [0, 2], sizes = [8, 1], strides = [1, 1]} : vector<8x9xf32> to vector<8x1xf32>
    %51 = vector.broadcast %50 : vector<8x1xf32> to vector<8x512xf32>
    %52 = arith.mulf %49, %51 : vector<8x512xf32>
    %53 = arith.addf %41, %52 : vector<8x512xf32>
    %c1_i32_19 = arith.constant 1 : i32
    %54 = vector.broadcast %c1_i32_19 : i32 to vector<1x512xi32>
    %55 = arith.cmpi sge, %14, %54 : vector<1x512xi32>
    %c1_i32_20 = arith.constant 1 : i32
    %56 = tpu.dynamic_rotate %12 by %c1_i32_20 dim 1 : vector<8x512xf32>, i32 -> vector<8x512xf32>
    %cst_21 = arith.constant 0.000000e+00 : f32
    %57 = vector.shape_cast %55 : vector<1x512xi1> to vector<1x512xi1>
    %58 = vector.broadcast %57 : vector<1x512xi1> to vector<8x512xi1>
    %59 = vector.broadcast %cst_21 : f32 to vector<8x512xf32>
    %60 = arith.select %58, %56, %59 : vector<8x512xi1>, vector<8x512xf32>
    %61 = vector.extract_strided_slice %15 {offsets = [0, 3], sizes = [8, 1], strides = [1, 1]} : vector<8x9xf32> to vector<8x1xf32>
    %62 = vector.broadcast %61 : vector<8x1xf32> to vector<8x512xf32>
    %63 = arith.mulf %60, %62 : vector<8x512xf32>
    %64 = arith.addf %53, %63 : vector<8x512xf32>
    %c14_i32_22 = arith.constant 14 : i32
    %65 = vector.broadcast %c14_i32_22 : i32 to vector<1x512xi32>
    %66 = arith.cmpi sle, %14, %65 : vector<1x512xi32>
    %c511_i32 = arith.constant 511 : i32
    %67 = tpu.dynamic_rotate %12 by %c511_i32 dim 1 : vector<8x512xf32>, i32 -> vector<8x512xf32>
    %cst_23 = arith.constant 0.000000e+00 : f32
    %68 = vector.shape_cast %66 : vector<1x512xi1> to vector<1x512xi1>
    %69 = vector.broadcast %68 : vector<1x512xi1> to vector<8x512xi1>
    %70 = vector.broadcast %cst_23 : f32 to vector<8x512xf32>
    %71 = arith.select %69, %67, %70 : vector<8x512xi1>, vector<8x512xf32>
    %72 = vector.extract_strided_slice %15 {offsets = [0, 5], sizes = [8, 1], strides = [1, 1]} : vector<8x9xf32> to vector<8x1xf32>
    %73 = vector.broadcast %72 : vector<8x1xf32> to vector<8x512xf32>
    %74 = arith.mulf %71, %73 : vector<8x512xf32>
    %75 = arith.addf %64, %74 : vector<8x512xf32>
    %c14_i32_24 = arith.constant 14 : i32
    %76 = vector.broadcast %c14_i32_24 : i32 to vector<1x512xi32>
    %77 = arith.cmpi sle, %13, %76 : vector<1x512xi32>
    %c1_i32_25 = arith.constant 1 : i32
    %78 = vector.broadcast %c1_i32_25 : i32 to vector<1x512xi32>
    %79 = arith.cmpi sge, %14, %78 : vector<1x512xi32>
    %80 = arith.andi %77, %79 : vector<1x512xi1>
    %c497_i32 = arith.constant 497 : i32
    %81 = tpu.dynamic_rotate %12 by %c497_i32 dim 1 : vector<8x512xf32>, i32 -> vector<8x512xf32>
    %cst_26 = arith.constant 0.000000e+00 : f32
    %82 = vector.shape_cast %80 : vector<1x512xi1> to vector<1x512xi1>
    %83 = vector.broadcast %82 : vector<1x512xi1> to vector<8x512xi1>
    %84 = vector.broadcast %cst_26 : f32 to vector<8x512xf32>
    %85 = arith.select %83, %81, %84 : vector<8x512xi1>, vector<8x512xf32>
    %86 = vector.extract_strided_slice %15 {offsets = [0, 6], sizes = [8, 1], strides = [1, 1]} : vector<8x9xf32> to vector<8x1xf32>
    %87 = vector.broadcast %86 : vector<8x1xf32> to vector<8x512xf32>
    %88 = arith.mulf %85, %87 : vector<8x512xf32>
    %89 = arith.addf %75, %88 : vector<8x512xf32>
    %c496_i32 = arith.constant 496 : i32
    %90 = tpu.dynamic_rotate %12 by %c496_i32 dim 1 : vector<8x512xf32>, i32 -> vector<8x512xf32>
    %cst_27 = arith.constant 0.000000e+00 : f32
    %91 = vector.shape_cast %77 : vector<1x512xi1> to vector<1x512xi1>
    %92 = vector.broadcast %91 : vector<1x512xi1> to vector<8x512xi1>
    %93 = vector.broadcast %cst_27 : f32 to vector<8x512xf32>
    %94 = arith.select %92, %90, %93 : vector<8x512xi1>, vector<8x512xf32>
    %95 = vector.extract_strided_slice %15 {offsets = [0, 7], sizes = [8, 1], strides = [1, 1]} : vector<8x9xf32> to vector<8x1xf32>
    %96 = vector.broadcast %95 : vector<8x1xf32> to vector<8x512xf32>
    %97 = arith.mulf %94, %96 : vector<8x512xf32>
    %98 = arith.addf %89, %97 : vector<8x512xf32>
    %c14_i32_28 = arith.constant 14 : i32
    %99 = vector.broadcast %c14_i32_28 : i32 to vector<1x512xi32>
    %100 = arith.cmpi sle, %14, %99 : vector<1x512xi32>
    %101 = arith.andi %77, %100 : vector<1x512xi1>
    %c495_i32 = arith.constant 495 : i32
    %102 = tpu.dynamic_rotate %12 by %c495_i32 dim 1 : vector<8x512xf32>, i32 -> vector<8x512xf32>
    %cst_29 = arith.constant 0.000000e+00 : f32
    %103 = vector.shape_cast %101 : vector<1x512xi1> to vector<1x512xi1>
    %104 = vector.broadcast %103 : vector<1x512xi1> to vector<8x512xi1>
    %105 = vector.broadcast %cst_29 : f32 to vector<8x512xf32>
    %106 = arith.select %104, %102, %105 : vector<8x512xi1>, vector<8x512xf32>
    %107 = vector.extract_strided_slice %15 {offsets = [0, 8], sizes = [8, 1], strides = [1, 1]} : vector<8x9xf32> to vector<8x1xf32>
    %108 = vector.broadcast %107 : vector<8x1xf32> to vector<8x512xf32>
    %109 = arith.mulf %106, %108 : vector<8x512xf32>
    %110 = arith.addf %98, %109 : vector<8x512xf32>
    %c0_30 = arith.constant 0 : index
    %c0_31 = arith.constant 0 : index
    %111 = vector.load %arg6[%c0_30, %c0_31] : memref<8x1xf32, #tpu.memory_space<vmem>>, vector<8x1xf32>
    %112 = vector.broadcast %111 : vector<8x1xf32> to vector<8x512xf32>
    %113 = arith.addf %110, %112 : vector<8x512xf32>
    %c0_32 = arith.constant 0 : index
    %c0_33 = arith.constant 0 : index
    %114 = vector.load %arg7[%c0_32, %c0_33] : memref<8x8xf32, #tpu.memory_space<vmem>>, vector<8x8xf32>
    %cst_34 = arith.constant dense<0.000000e+00> : vector<8x512xf32>
    %115 = tpu.matmul %114, %113, %cst_34 {dimension_numbers = #tpu.dot_dimension_numbers<[1], [0], [0], [1], [0, 0, 1, 1], [], []>} : vector<8x8xf32>, vector<8x512xf32>, vector<8x512xf32> -> vector<8x512xf32>
    %c0_35 = arith.constant 0 : index
    %c0_36 = arith.constant 0 : index
    %116 = vector.load %arg8[%c0_35, %c0_36] : memref<8x1xf32, #tpu.memory_space<vmem>>, vector<8x1xf32>
    %117 = vector.broadcast %116 : vector<8x1xf32> to vector<8x512xf32>
    %118 = arith.addf %115, %117 : vector<8x512xf32>
    %c0_37 = arith.constant 0 : index
    %c0_38 = arith.constant 0 : index
    %c0_39 = arith.constant 0 : index
    %119 = vector.load %arg11[%c0_37, %c0_38, %c0_39] : memref<1x8x512xf32, #tpu.memory_space<vmem>>, vector<1x8x512xf32>
    %120 = vector.shape_cast %119 : vector<1x8x512xf32> to vector<8x512xf32>
    %121 = vector.shape_cast %118 : vector<8x512xf32> to vector<1x8x512xf32>
    tpu.vector_store %arg11[%c0_37, %c0_38, %c0_39], %121 {strides = array<i32>} : memref<1x8x512xf32, #tpu.memory_space<vmem>>, vector<1x8x512xf32>,
    return
  }
  func.func @transform_0(%arg0: i32) -> (i32, i32, i32) {
    %c0_i32 = arith.constant 0 : i32
    %c0_i32_0 = arith.constant 0 : i32
    %c0_i32_1 = arith.constant 0 : i32
    return %arg0, %c0_i32, %c0_i32_0 : i32, i32, i32
  }
  func.func @transform_1(%arg0: i32) -> (i32, i32) {
    %c0_i32 = arith.constant 0 : i32
    %c0_i32_0 = arith.constant 0 : i32
    %c0_i32_1 = arith.constant 0 : i32
    return %c0_i32, %c0_i32_0 : i32, i32
  }
  func.func @transform_2(%arg0: i32) -> (i32, i32) {
    %c0_i32 = arith.constant 0 : i32
    %c0_i32_0 = arith.constant 0 : i32
    %c0_i32_1 = arith.constant 0 : i32
    return %c0_i32, %c0_i32_0 : i32, i32
  }
  func.func @transform_3(%arg0: i32) -> (i32, i32) {
    %c0_i32 = arith.constant 0 : i32
    %c0_i32_0 = arith.constant 0 : i32
    %c0_i32_1 = arith.constant 0 : i32
    return %c0_i32, %c0_i32_0 : i32, i32
  }
  func.func @transform_4(%arg0: i32) -> (i32, i32) {
    %c0_i32 = arith.constant 0 : i32
    %c0_i32_0 = arith.constant 0 : i32
    %c0_i32_1 = arith.constant 0 : i32
    return %c0_i32, %c0_i32_0 : i32, i32
  }
  func.func @transform_5(%arg0: i32) -> (i32, i32) {
    %c0_i32 = arith.constant 0 : i32
    %c0_i32_0 = arith.constant 0 : i32
    %c0_i32_1 = arith.constant 0 : i32
    return %c0_i32, %c0_i32_0 : i32, i32
  }
  func.func @transform_6(%arg0: i32) -> (i32, i32) {
    %c0_i32 = arith.constant 0 : i32
    %c0_i32_0 = arith.constant 0 : i32
    %c0_i32_1 = arith.constant 0 : i32
    return %c0_i32, %c0_i32_0 : i32, i32
  }
  func.func @transform_7(%arg0: i32) -> (i32, i32) {
    %c0_i32 = arith.constant 0 : i32
    %c0_i32_0 = arith.constant 0 : i32
    %c0_i32_1 = arith.constant 0 : i32
    return %c0_i32, %c0_i32_0 : i32, i32
  }
  func.func @transform_8(%arg0: i32) -> (i32, i32) {
    %c0_i32 = arith.constant 0 : i32
    %c0_i32_0 = arith.constant 0 : i32
    %c0_i32_1 = arith.constant 0 : i32
    return %c0_i32, %c0_i32_0 : i32, i32
  }
  func.func @transform_9(%arg0: i32) -> (i32, i32) {
    %c0_i32 = arith.constant 0 : i32
    %c0_i32_0 = arith.constant 0 : i32
    %c0_i32_1 = arith.constant 0 : i32
    return %c0_i32, %c0_i32_0 : i32, i32
  }
  func.func @transform_10(%arg0: i32) -> (i32, i32, i32) {
    %c0_i32 = arith.constant 0 : i32
    %c0_i32_0 = arith.constant 0 : i32
    %c0_i32_1 = arith.constant 0 : i32
    return %arg0, %c0_i32, %c0_i32_0 : i32, i32, i32
  }
}

</mosaic_0001>

<llo_original>
// kernel: depth_conv_forward.1
$region0: #{depth_conv_forward.1}
  #allocation0 [shape = 'u32[]', space=smem, size = 0x4, offset = 0x4, fixed_abs, tag = 'smem constant byte address 0x4 - core index']
  #allocation1 [shape = 'u32[144,128]{1,0:T(1,128)}', space=vmem, size = 0x12000, scoped, tag = 'internal scratch']
  %s0 = inlined_call_operand.vmem [shape: f32[1,4,512], index: 0, kind: input, shape index: {}]
  %s1 = inlined_call_operand.vmem [shape: f32[8,4], index: 1, kind: input, shape index: {}]
  %s2 = inlined_call_operand.vmem [shape: f32[8,1], index: 2, kind: input, shape index: {}]
  %s3 = inlined_call_operand.vmem [shape: f32[8,1], index: 3, kind: input, shape index: {}]
  %s4 = inlined_call_operand.vmem [shape: f32[8,9], index: 4, kind: input, shape index: {}]
  %s5 = inlined_call_operand.vmem [shape: f32[8,1], index: 5, kind: input, shape index: {}]
  %s6 = inlined_call_operand.vmem [shape: f32[8,8], index: 6, kind: input, shape index: {}]
  %s7 = inlined_call_operand.vmem [shape: f32[8,1], index: 7, kind: input, shape index: {}]
  %s8 = inlined_call_operand.vmem [shape: s32[1,512], index: 8, kind: input, shape index: {}]
  %s9 = inlined_call_operand.vmem [shape: s32[1,512], index: 9, kind: input, shape index: {}]
  %s10 = inlined_call_operand.vmem [shape: f32[1,8,512], index: 10, kind: output, shape index: {}]
  %s11 = sld [smem:[#allocation0]]
  $region50: #{depth_conv_forward.1} parent=0
    _
  %s13 = ssub.s32 1, %s11
  %s14 = scalar_select 0, %s13, %s11
  // Predicated region
  $region2: #{depth_conv_forward.1} parent=0 // pred_check
    _
  $region3: #{depth_conv_forward.1} parent=0 // pred_check_branch
    %16 = sbr.rel (0) target = $region5
  $region4: #{depth_conv_forward.1} parent=0 // pred_region
    _
  $region5: #{depth_conv_forward.1} parent=0 // pred_fallthru
    _
  // Predicated region
  $region6: #{depth_conv_forward.1} parent=0 // pred_check
    _
  $region7: #{depth_conv_forward.1} parent=0 // pred_check_branch
    %18 = sbr.rel (0) target = $region9
  $region8: #{depth_conv_forward.1} parent=0 // pred_region
    _
  $region9: #{depth_conv_forward.1} parent=0 // pred_fallthru
    _
  // Predicated region
  $region10: #{depth_conv_forward.1} parent=0 // pred_check
    _
  $region11: #{depth_conv_forward.1} parent=0 // pred_check_branch
    %20 = sbr.rel (0) target = $region13
  $region12: #{depth_conv_forward.1} parent=0 // pred_region
    _
  $region13: #{depth_conv_forward.1} parent=0 // pred_fallthru
    _
  // Predicated region
  $region14: #{depth_conv_forward.1} parent=0 // pred_check
    _
  $region15: #{depth_conv_forward.1} parent=0 // pred_check_branch
    %22 = sbr.rel (0) target = $region17
  $region16: #{depth_conv_forward.1} parent=0 // pred_region
    _
  $region17: #{depth_conv_forward.1} parent=0 // pred_fallthru
    _
  // Predicated region
  $region18: #{depth_conv_forward.1} parent=0 // pred_check
    _
  $region19: #{depth_conv_forward.1} parent=0 // pred_check_branch
    %24 = sbr.rel (0) target = $region21
  $region20: #{depth_conv_forward.1} parent=0 // pred_region
    _
  $region21: #{depth_conv_forward.1} parent=0 // pred_fallthru
    _
  // Predicated region
  $region22: #{depth_conv_forward.1} parent=0 // pred_check
    _
  $region23: #{depth_conv_forward.1} parent=0 // pred_check_branch
    %26 = sbr.rel (0) target = $region25
  $region24: #{depth_conv_forward.1} parent=0 // pred_region
    _
  $region25: #{depth_conv_forward.1} parent=0 // pred_fallthru
    _
  // Predicated region
  $region26: #{depth_conv_forward.1} parent=0 // pred_check
    _
  $region27: #{depth_conv_forward.1} parent=0 // pred_check_branch
    %28 = sbr.rel (0) target = $region29
  $region28: #{depth_conv_forward.1} parent=0 // pred_region
    _
  $region29: #{depth_conv_forward.1} parent=0 // pred_fallthru
    _
  // Predicated region
  $region30: #{depth_conv_forward.1} parent=0 // pred_check
    _
  $region31: #{depth_conv_forward.1} parent=0 // pred_check_branch
    %30 = sbr.rel (0) target = $region33
  $region32: #{depth_conv_forward.1} parent=0 // pred_region
    _
  $region33: #{depth_conv_forward.1} parent=0 // pred_fallthru
    _
  // Predicated region
  $region34: #{depth_conv_forward.1} parent=0 // pred_check
    _
  $region35: #{depth_conv_forward.1} parent=0 // pred_check_branch
    %32 = sbr.rel (0) target = $region37
  $region36: #{depth_conv_forward.1} parent=0 // pred_region
    _
  $region37: #{depth_conv_forward.1} parent=0 // pred_fallthru
    _
  // Predicated region
  $region38: #{depth_conv_forward.1} parent=0 // pred_check
    _
  $region39: #{depth_conv_forward.1} parent=0 // pred_check_branch
    %34 = sbr.rel (0) target = $region41
  $region40: #{depth_conv_forward.1} parent=0 // pred_region
    _
  $region41: #{depth_conv_forward.1} parent=0 // pred_fallthru
    _
  %v35 = vld [vmem:[%s0] sm:$0xff]
  %v36 = vld [vmem:[%s0 + $0x8] sm:$0xff]
  %v37 = vld [vmem:[%s1] sm:$0xff]
  %v38 = vld [vmem:[%s2] sm:$0xff]
  %40 = vset.pattern.permute.xlu0 0
  %41 = vperm.xlu0 %40, %v38
  %v42 = vpop.permute.xlu0 %41
  %v46 = vcombine.high %v35, %v35
  %v47 = vcombine.high %v36, %v36
  %vm48 = vcmask 31744
  %v50 = vsel %vm48, %v37, 0
  %vm52 = vcmask 1043456
  %v53 = vsel %vm52, %v35, 0
  %v55 = vsel %vm52, %v46, 0
  %v57 = vsel %vm52, %v36, 0
  %v59 = vsel %vm52, %v47, 0
  %61 = vmatprep.subr.mxu0 %v55
  %62 = vmatpush1.msra.mxu0 %v53
  %63 = vmatprep.subr.mxu0 0.0
  %64 = vmatpush1.msra.mxu0 0.0
  %65 = vmatprep.subr.mxu0 0.0
  %66 = vmatpush1.msra.mxu0 0.0
  %67 = vmatprep.subr.mxu0 0.0
  %68 = vmatpush1.msra.mxu0 0.0
  %69 = vmatprep.subr.mxu0 0.0
  %70 = vmatpush1.msra.mxu0 0.0
  %71 = vmatprep.subr.mxu0 0.0
  %72 = vmatpush1.msra.mxu0 0.0
  %73 = vmatprep.subr.mxu0 0.0
  %74 = vmatpush1.msra.mxu0 0.0
  %75 = vmatprep.subr.mxu0 0.0
  %76 = vmatpush1.msra.mxu0 0.0
  %77 = vmatprep.subr.mxu0 0.0
  %78 = vmatpush1.msra.mxu0 0.0
  %79 = vmatprep.subr.mxu0 0.0
  %80 = vmatpush1.msra.mxu0 0.0
  %81 = vmatprep.subr.mxu0 0.0
  %82 = vmatpush1.msra.mxu0 0.0
  %83 = vmatprep.subr.mxu0 0.0
  %84 = vmatpush1.msra.mxu0 0.0
  %85 = vmatprep.subr.mxu0 0.0
  %86 = vmatpush1.msra.mxu0 0.0
  %87 = vmatprep.subr.mxu0 0.0
  %88 = vmatpush1.msra.mxu0 0.0
  %89 = vmatprep.subr.mxu0 0.0
  %90 = vmatpush1.msra.mxu0 0.0
  %91 = vmatprep.subr.mxu0 0.0
  %92 = vmatpush1.msra.mxu0 0.0
  %93 = vmatprep.subr.mxu0 0.0
  %94 = vmatpush1.msra.mxu0 0.0
  %95 = vmatprep.subr.mxu0 0.0
  %96 = vmatpush1.msra.mxu0 0.0
  %97 = vmatprep.subr.mxu0 0.0
  %98 = vmatpush1.msra.mxu0 0.0
  %99 = vmatprep.subr.mxu0 0.0
  %100 = vmatpush1.msra.mxu0 0.0
  %101 = vmatprep.subr.mxu0 0.0
  %102 = vmatpush1.msra.mxu0 0.0
  %103 = vmatprep.subr.mxu0 0.0
  %104 = vmatpush1.msra.mxu0 0.0
  %105 = vmatprep.subr.mxu0 0.0
  %106 = vmatpush1.msra.mxu0 0.0
  %107 = vmatprep.subr.mxu0 0.0
  %108 = vmatpush1.msra.mxu0 0.0
  %109 = vmatprep.subr.mxu0 0.0
  %110 = vmatpush1.msra.mxu0 0.0
  %111 = vmatprep.subr.mxu0 0.0
  %112 = vmatpush1.msra.mxu0 0.0
  %113 = vmatprep.subr.mxu0 0.0
  %114 = vmatpush1.msra.mxu0 0.0
  %115 = vmatprep.subr.mxu0 0.0
  %116 = vmatpush1.msra.mxu0 0.0
  %117 = vmatprep.subr.mxu0 0.0
  %118 = vmatpush1.msra.mxu0 0.0
  %119 = vmatprep.subr.mxu0 0.0
  %120 = vmatpush1.msra.mxu0 0.0
  %121 = vmatprep.subr.mxu0 0.0
  %122 = vmatpush1.msra.mxu0 0.0
  %123 = vmatprep.subr.mxu0 0.0
  %124 = vmatpush1.msra.mxu0 0.0
  %125 = vmatprep.mubr.f32.mxu0 0.0
  %126 = vmatmul.mubr.f32.gmra.mrb[0].mxu0 %v50
  %v127 = vpop.f32.mrb[0].mxu0
  %v128 = vadd.f32 %v42, %v127
  %v129 = vpop.f32.mrb[0].mxu0
  %v130 = vadd.f32 %v42, %v129
  %131 = vdwg.mxu0
  %132 = vmatprep.subr.mxu0 %v59
  %133 = vmatpush1.msra.mxu0 %v57
  %134 = vmatprep.subr.mxu0 0.0
  %135 = vmatpush1.msra.mxu0 0.0
  %136 = vmatprep.subr.mxu0 0.0
  %137 = vmatpush1.msra.mxu0 0.0
  %138 = vmatprep.subr.mxu0 0.0
  %139 = vmatpush1.msra.mxu0 0.0
  %140 = vmatprep.subr.mxu0 0.0
  %141 = vmatpush1.msra.mxu0 0.0
  %142 = vmatprep.subr.mxu0 0.0
  %143 = vmatpush1.msra.mxu0 0.0
  %144 = vmatprep.subr.mxu0 0.0
  %145 = vmatpush1.msra.mxu0 0.0
  %146 = vmatprep.subr.mxu0 0.0
  %147 = vmatpush1.msra.mxu0 0.0
  %148 = vmatprep.subr.mxu0 0.0
  %149 = vmatpush1.msra.mxu0 0.0
  %150 = vmatprep.subr.mxu0 0.0
  %151 = vmatpush1.msra.mxu0 0.0
  %152 = vmatprep.subr.mxu0 0.0
  %153 = vmatpush1.msra.mxu0 0.0
  %154 = vmatprep.subr.mxu0 0.0
  %155 = vmatpush1.msra.mxu0 0.0
  %156 = vmatprep.subr.mxu0 0.0
  %157 = vmatpush1.msra.mxu0 0.0
  %158 = vmatprep.subr.mxu0 0.0
  %159 = vmatpush1.msra.mxu0 0.0
  %160 = vmatprep.subr.mxu0 0.0
  %161 = vmatpush1.msra.mxu0 0.0
  %162 = vmatprep.subr.mxu0 0.0
  %163 = vmatpush1.msra.mxu0 0.0
  %164 = vmatprep.subr.mxu0 0.0
  %165 = vmatpush1.msra.mxu0 0.0
  %166 = vmatprep.subr.mxu0 0.0
  %167 = vmatpush1.msra.mxu0 0.0
  %168 = vmatprep.subr.mxu0 0.0
  %169 = vmatpush1.msra.mxu0 0.0
  %170 = vmatprep.subr.mxu0 0.0
  %171 = vmatpush1.msra.mxu0 0.0
  %172 = vmatprep.subr.mxu0 0.0
  %173 = vmatpush1.msra.mxu0 0.0
  %174 = vmatprep.subr.mxu0 0.0
  %175 = vmatpush1.msra.mxu0 0.0
  %176 = vmatprep.subr.mxu0 0.0
  %177 = vmatpush1.msra.mxu0 0.0
  %178 = vmatprep.subr.mxu0 0.0
  %179 = vmatpush1.msra.mxu0 0.0
  %180 = vmatprep.subr.mxu0 0.0
  %181 = vmatpush1.msra.mxu0 0.0
  %182 = vmatprep.subr.mxu0 0.0
  %183 = vmatpush1.msra.mxu0 0.0
  %184 = vmatprep.subr.mxu0 0.0
  %185 = vmatpush1.msra.mxu0 0.0
  %186 = vmatprep.subr.mxu0 0.0
  %187 = vmatpush1.msra.mxu0 0.0
  %188 = vmatprep.subr.mxu0 0.0
  %189 = vmatpush1.msra.mxu0 0.0
  %190 = vmatprep.subr.mxu0 0.0
  %191 = vmatpush1.msra.mxu0 0.0
  %192 = vmatprep.subr.mxu0 0.0
  %193 = vmatpush1.msra.mxu0 0.0
  %194 = vmatprep.subr.mxu0 0.0
  %195 = vmatpush1.msra.mxu0 0.0
  %196 = vmatprep.mubr.f32.mxu0 0.0
  %197 = vmatmul.mubr.f32.gmra.mrb[0].mxu0 %v50
  %v198 = vpop.f32.mrb[0].mxu0
  %v199 = vadd.f32 %v42, %v198
  %v200 = vpop.f32.mrb[0].mxu0
  %v201 = vadd.f32 %v42, %v200
  %202 = vdwg.mxu0
  %vm203 = vcmp.ge.f32.partialorder %v128, 0.0
  %vm204 = vcmp.ge.f32.partialorder %v130, 0.0
  %vm205 = vcmp.ge.f32.partialorder %v199, 0.0
  %vm206 = vcmp.ge.f32.partialorder %v201, 0.0
  %v207 = vld [vmem:[%s3] sm:$0xff]
  %209 = vset.pattern.permute.xlu0 0
  %210 = vperm.xlu0 %209, %v207
  %v211 = vpop.permute.xlu0 %210
  %v213 = vmul.f32 %v211, %v128
  %v214 = vmul.f32 %v211, %v130
  %v215 = vmul.f32 %v211, %v199
  %v216 = vmul.f32 %v211, %v201
  %v217 = vsel %vm203, %v128, %v213
  %v218 = vsel %vm204, %v130, %v214
  %v219 = vsel %vm205, %v199, %v215
  %v220 = vsel %vm206, %v201, %v216
  %v221 = vld [vmem:[%s8] sm:$0xf]
  %v222 = vld [vmem:[%s9] sm:$0xf]
  %v223 = vld [vmem:[%s4] sm:$0xff]
  %225 = vset.pattern.permute.xlu0 4
  %226 = vperm.xlu0 %225, %v223
  %v227 = vpop.permute.xlu0 %226
  %v229 = vmul.f32 %v217, %v227
  %v230 = vmul.f32 %v218, %v227
  %v231 = vmul.f32 %v219, %v227
  %v232 = vmul.f32 %v220, %v227
  %vm233 = vcmp.ge.s32.totalorder %v221, 1
  %vm234 = vcmp.ge.s32.totalorder %v222, 1
  %vm235 = vmand %vm233, %vm234
  %236 = vrot.lane.b32.xlu0 %v217, 17
  %v237 = vpop.permute.xlu0 %236
  %238 = vrot.lane.b32.xlu0 %v218, 17
  %v239 = vpop.permute.xlu0 %238
  %240 = vrot.lane.b32.xlu0 %v219, 17
  %v241 = vpop.permute.xlu0 %240
  %242 = vrot.lane.b32.xlu0 %v220, 17
  %v243 = vpop.permute.xlu0 %242
  %v244 = vlaneseq
  %v245 = vand.u32 %v244, 127
  %vm246 = vcmp.lt.s32.totalorder %v245, 17
  %v247 = vsel %vm246, %v241, %v243
  %v248 = vsel %vm246, %v239, %v241
  %v249 = vsel %vm246, %v237, %v239
  %v250 = vsel %vm246, %v243, %v237
  %v251 = vsel %vm235, 1, 0
  %v252 = vlaneseq
  %v253 = vshrl.u32 %v252, 7
  %v254 = vsub.s32 0, %v253
  %v255 = vrot.slane %v251, %v254
  %v256 = vlaneseq
  %v257 = vshrl.u32 %v256, 7
  %v258 = vsub.s32 1, %v257
  %v259 = vrot.slane %v251, %v258
  %v260 = vlaneseq
  %v261 = vshrl.u32 %v260, 7
  %v262 = vsub.s32 2, %v261
  %v263 = vrot.slane %v251, %v262
  %v264 = vlaneseq
  %v265 = vshrl.u32 %v264, 7
  %v266 = vsub.s32 3, %v265
  %v267 = vrot.slane %v251, %v266
  %vm268 = vcmp.eq.s32.totalorder %v255, 1
  %vm269 = vcmp.eq.s32.totalorder %v259, 1
  %vm270 = vcmp.eq.s32.totalorder %v263, 1
  %vm271 = vcmp.eq.s32.totalorder %v267, 1
  %v272 = vsel %vm268, %v250, 0.0
  %v273 = vsel %vm269, %v249, 0.0
  %v274 = vsel %vm270, %v248, 0.0
  %v275 = vsel %vm271, %v247, 0.0
  %276 = vset.pattern.permute.xlu0 0
  %277 = vperm.xlu0 %276, %v223
  %v278 = vpop.permute.xlu0 %277
  %v280 = vmul.f32 %v272, %v278
  %v281 = vmul.f32 %v273, %v278
  %v282 = vmul.f32 %v274, %v278
  %v283 = vmul.f32 %v275, %v278
  %v284 = vadd.f32 %v229, %v280
  %v285 = vadd.f32 %v230, %v281
  %v286 = vadd.f32 %v231, %v282
  %v287 = vadd.f32 %v232, %v283
  %288 = vrot.lane.b32.xlu0 %v217, 16
  %v289 = vpop.permute.xlu0 %288
  %290 = vrot.lane.b32.xlu0 %v218, 16
  %v291 = vpop.permute.xlu0 %290
  %292 = vrot.lane.b32.xlu0 %v219, 16
  %v293 = vpop.permute.xlu0 %292
  %294 = vrot.lane.b32.xlu0 %v220, 16
  %v295 = vpop.permute.xlu0 %294
  %vm296 = vcmp.lt.s32.totalorder %v245, 16
  %v297 = vsel %vm296, %v293, %v295
  %v298 = vsel %vm296, %v291, %v293
  %v299 = vsel %vm296, %v289, %v291
  %v300 = vsel %vm296, %v295, %v289
  %v301 = vsel %vm233, 1, 0
  %v302 = vlaneseq
  %v303 = vshrl.u32 %v302, 7
  %v304 = vsub.s32 0, %v303
  %v305 = vrot.slane %v301, %v304
  %v306 = vlaneseq
  %v307 = vshrl.u32 %v306, 7
  %v308 = vsub.s32 1, %v307
  %v309 = vrot.slane %v301, %v308
  %v310 = vlaneseq
  %v311 = vshrl.u32 %v310, 7
  %v312 = vsub.s32 2, %v311
  %v313 = vrot.slane %v301, %v312
  %v314 = vlaneseq
  %v315 = vshrl.u32 %v314, 7
  %v316 = vsub.s32 3, %v315
  %v317 = vrot.slane %v301, %v316
  %vm318 = vcmp.eq.s32.totalorder %v305, 1
  %vm319 = vcmp.eq.s32.totalorder %v309, 1
  %vm320 = vcmp.eq.s32.totalorder %v313, 1
  %vm321 = vcmp.eq.s32.totalorder %v317, 1
  %v322 = vsel %vm318, %v300, 0.0
  %v323 = vsel %vm319, %v299, 0.0
  %v324 = vsel %vm320, %v298, 0.0
  %v325 = vsel %vm321, %v297, 0.0
  %326 = vset.pattern.permute.xlu0 1
  %327 = vperm.xlu0 %326, %v223
  %v328 = vpop.permute.xlu0 %327
  %v330 = vmul.f32 %v322, %v328
  %v331 = vmul.f32 %v323, %v328
  %v332 = vmul.f32 %v324, %v328
  %v333 = vmul.f32 %v325, %v328
  %v334 = vadd.f32 %v284, %v330
  %v335 = vadd.f32 %v285, %v331
  %v336 = vadd.f32 %v286, %v332
  %v337 = vadd.f32 %v287, %v333
  %vm338 = vcmp.le.s32.totalorder %v222, 14
  %vm339 = vmand %vm233, %vm338
  %340 = vrot.lane.b32.xlu0 %v217, 15
  %v341 = vpop.permute.xlu0 %340
  %342 = vrot.lane.b32.xlu0 %v218, 15
  %v343 = vpop.permute.xlu0 %342
  %344 = vrot.lane.b32.xlu0 %v219, 15
  %v345 = vpop.permute.xlu0 %344
  %346 = vrot.lane.b32.xlu0 %v220, 15
  %v347 = vpop.permute.xlu0 %346
  %vm348 = vcmp.lt.s32.totalorder %v245, 15
  %v349 = vsel %vm348, %v345, %v347
  %v350 = vsel %vm348, %v343, %v345
  %v351 = vsel %vm348, %v341, %v343
  %v352 = vsel %vm348, %v347, %v341
  %v353 = vsel %vm339, 1, 0
  %v354 = vlaneseq
  %v355 = vshrl.u32 %v354, 7
  %v356 = vsub.s32 0, %v355
  %v357 = vrot.slane %v353, %v356
  %v358 = vlaneseq
  %v359 = vshrl.u32 %v358, 7
  %v360 = vsub.s32 1, %v359
  %v361 = vrot.slane %v353, %v360
  %v362 = vlaneseq
  %v363 = vshrl.u32 %v362, 7
  %v364 = vsub.s32 2, %v363
  %v365 = vrot.slane %v353, %v364
  %v366 = vlaneseq
  %v367 = vshrl.u32 %v366, 7
  %v368 = vsub.s32 3, %v367
  %v369 = vrot.slane %v353, %v368
  %vm370 = vcmp.eq.s32.totalorder %v357, 1
  %vm371 = vcmp.eq.s32.totalorder %v361, 1
  %vm372 = vcmp.eq.s32.totalorder %v365, 1
  %vm373 = vcmp.eq.s32.totalorder %v369, 1
  %v374 = vsel %vm370, %v352, 0.0
  %v375 = vsel %vm371, %v351, 0.0
  %v376 = vsel %vm372, %v350, 0.0
  %v377 = vsel %vm373, %v349, 0.0
  %378 = vset.pattern.permute.xlu0 2
  %379 = vperm.xlu0 %378, %v223
  %v380 = vpop.permute.xlu0 %379
  %v382 = vmul.f32 %v374, %v380
  %v383 = vmul.f32 %v375, %v380
  %v384 = vmul.f32 %v376, %v380
  %v385 = vmul.f32 %v377, %v380
  %v386 = vadd.f32 %v334, %v382
  %v387 = vadd.f32 %v335, %v383
  %v388 = vadd.f32 %v336, %v384
  %v389 = vadd.f32 %v337, %v385
  %390 = vrot.lane.b32.xlu0 %v217, 1
  %v391 = vpop.permute.xlu0 %390
  %392 = vrot.lane.b32.xlu0 %v218, 1
  %v393 = vpop.permute.xlu0 %392
  %394 = vrot.lane.b32.xlu0 %v219, 1
  %v395 = vpop.permute.xlu0 %394
  %396 = vrot.lane.b32.xlu0 %v220, 1
  %v397 = vpop.permute.xlu0 %396
  %vm398 = vcmp.lt.s32.totalorder %v245, 1
  %v399 = vsel %vm398, %v395, %v397
  %v400 = vsel %vm398, %v393, %v395
  %v401 = vsel %vm398, %v391, %v393
  %v402 = vsel %vm398, %v397, %v391
  %v403 = vsel %vm234, 1, 0
  %v404 = vlaneseq
  %v405 = vshrl.u32 %v404, 7
  %v406 = vsub.s32 0, %v405
  %v407 = vrot.slane %v403, %v406
  %v408 = vlaneseq
  %v409 = vshrl.u32 %v408, 7
  %v410 = vsub.s32 1, %v409
  %v411 = vrot.slane %v403, %v410
  %v412 = vlaneseq
  %v413 = vshrl.u32 %v412, 7
  %v414 = vsub.s32 2, %v413
  %v415 = vrot.slane %v403, %v414
  %v416 = vlaneseq
  %v417 = vshrl.u32 %v416, 7
  %v418 = vsub.s32 3, %v417
  %v419 = vrot.slane %v403, %v418
  %vm420 = vcmp.eq.s32.totalorder %v407, 1
  %vm421 = vcmp.eq.s32.totalorder %v411, 1
  %vm422 = vcmp.eq.s32.totalorder %v415, 1
  %vm423 = vcmp.eq.s32.totalorder %v419, 1
  %v424 = vsel %vm420, %v402, 0.0
  %v425 = vsel %vm421, %v401, 0.0
  %v426 = vsel %vm422, %v400, 0.0
  %v427 = vsel %vm423, %v399, 0.0
  %428 = vset.pattern.permute.xlu0 3
  %429 = vperm.xlu0 %428, %v223
  %v430 = vpop.permute.xlu0 %429
  %v432 = vmul.f32 %v424, %v430
  %v433 = vmul.f32 %v425, %v430
  %v434 = vmul.f32 %v426, %v430
  %v435 = vmul.f32 %v427, %v430
  %v436 = vadd.f32 %v386, %v432
  %v437 = vadd.f32 %v387, %v433
  %v438 = vadd.f32 %v388, %v434
  %v439 = vadd.f32 %v389, %v435
  %440 = vrot.lane.b32.xlu0 %v217, 127
  %v441 = vpop.permute.xlu0 %440
  %442 = vrot.lane.b32.xlu0 %v218, 127
  %v443 = vpop.permute.xlu0 %442
  %444 = vrot.lane.b32.xlu0 %v219, 127
  %v445 = vpop.permute.xlu0 %444
  %446 = vrot.lane.b32.xlu0 %v220, 127
  %v447 = vpop.permute.xlu0 %446
  %vm448 = vcmp.lt.s32.totalorder %v245, 127
  %v449 = vsel %vm448, %v445, %v447
  %v450 = vsel %vm448, %v443, %v445
  %v451 = vsel %vm448, %v441, %v443
  %v452 = vsel %vm448, %v447, %v441
  %v453 = vsel %vm338, 1, 0
  %v454 = vlaneseq
  %v455 = vshrl.u32 %v454, 7
  %v456 = vsub.s32 0, %v455
  %v457 = vrot.slane %v453, %v456
  %v458 = vlaneseq
  %v459 = vshrl.u32 %v458, 7
  %v460 = vsub.s32 1, %v459
  %v461 = vrot.slane %v453, %v460
  %v462 = vlaneseq
  %v463 = vshrl.u32 %v462, 7
  %v464 = vsub.s32 2, %v463
  %v465 = vrot.slane %v453, %v464
  %v466 = vlaneseq
  %v467 = vshrl.u32 %v466, 7
  %v468 = vsub.s32 3, %v467
  %v469 = vrot.slane %v453, %v468
  %vm470 = vcmp.eq.s32.totalorder %v457, 1
  %vm471 = vcmp.eq.s32.totalorder %v461, 1
  %vm472 = vcmp.eq.s32.totalorder %v465, 1
  %vm473 = vcmp.eq.s32.totalorder %v469, 1
  %v474 = vsel %vm470, %v451, 0.0
  %v475 = vsel %vm471, %v450, 0.0
  %v476 = vsel %vm472, %v449, 0.0
  %v477 = vsel %vm473, %v452, 0.0
  %478 = vset.pattern.permute.xlu0 5
  %479 = vperm.xlu0 %478, %v223
  %v480 = vpop.permute.xlu0 %479
  %v482 = vmul.f32 %v474, %v480
  %v483 = vmul.f32 %v475, %v480
  %v484 = vmul.f32 %v476, %v480
  %v485 = vmul.f32 %v477, %v480
  %v486 = vadd.f32 %v436, %v482
  %v487 = vadd.f32 %v437, %v483
  %v488 = vadd.f32 %v438, %v484
  %v489 = vadd.f32 %v439, %v485
  %vm490 = vcmp.le.s32.totalorder %v221, 14
  %vm491 = vmand %vm490, %vm234
  %492 = vrot.lane.b32.xlu0 %v217, 113
  %v493 = vpop.permute.xlu0 %492
  %494 = vrot.lane.b32.xlu0 %v218, 113
  %v495 = vpop.permute.xlu0 %494
  %496 = vrot.lane.b32.xlu0 %v219, 113
  %v497 = vpop.permute.xlu0 %496
  %498 = vrot.lane.b32.xlu0 %v220, 113
  %v499 = vpop.permute.xlu0 %498
  %vm500 = vcmp.lt.s32.totalorder %v245, 113
  %v501 = vsel %vm500, %v497, %v499
  %v502 = vsel %vm500, %v495, %v497
  %v503 = vsel %vm500, %v493, %v495
  %v504 = vsel %vm500, %v499, %v493
  %v505 = vsel %vm491, 1, 0
  %v506 = vlaneseq
  %v507 = vshrl.u32 %v506, 7
  %v508 = vsub.s32 0, %v507
  %v509 = vrot.slane %v505, %v508
  %v510 = vlaneseq
  %v511 = vshrl.u32 %v510, 7
  %v512 = vsub.s32 1, %v511
  %v513 = vrot.slane %v505, %v512
  %v514 = vlaneseq
  %v515 = vshrl.u32 %v514, 7
  %v516 = vsub.s32 2, %v515
  %v517 = vrot.slane %v505, %v516
  %v518 = vlaneseq
  %v519 = vshrl.u32 %v518, 7
  %v520 = vsub.s32 3, %v519
  %v521 = vrot.slane %v505, %v520
  %vm522 = vcmp.eq.s32.totalorder %v509, 1
  %vm523 = vcmp.eq.s32.totalorder %v513, 1
  %vm524 = vcmp.eq.s32.totalorder %v517, 1
  %vm525 = vcmp.eq.s32.totalorder %v521, 1
  %v526 = vsel %vm522, %v503, 0.0
  %v527 = vsel %vm523, %v502, 0.0
  %v528 = vsel %vm524, %v501, 0.0
  %v529 = vsel %vm525, %v504, 0.0
  %530 = vset.pattern.permute.xlu0 6
  %531 = vperm.xlu0 %530, %v223
  %v532 = vpop.permute.xlu0 %531
  %v534 = vmul.f32 %v526, %v532
  %v535 = vmul.f32 %v527, %v532
  %v536 = vmul.f32 %v528, %v532
  %v537 = vmul.f32 %v529, %v532
  %v538 = vadd.f32 %v486, %v534
  %v539 = vadd.f32 %v487, %v535
  %v540 = vadd.f32 %v488, %v536
  %v541 = vadd.f32 %v489, %v537
  %542 = vrot.lane.b32.xlu0 %v217, 112
  %v543 = vpop.permute.xlu0 %542
  %544 = vrot.lane.b32.xlu0 %v218, 112
  %v545 = vpop.permute.xlu0 %544
  %546 = vrot.lane.b32.xlu0 %v219, 112
  %v547 = vpop.permute.xlu0 %546
  %548 = vrot.lane.b32.xlu0 %v220, 112
  %v549 = vpop.permute.xlu0 %548
  %vm550 = vcmp.lt.s32.totalorder %v245, 112
  %v551 = vsel %vm550, %v547, %v549
  %v552 = vsel %vm550, %v545, %v547
  %v553 = vsel %vm550, %v543, %v545
  %v554 = vsel %vm550, %v549, %v543
  %v555 = vsel %vm490, 1, 0
  %v556 = vlaneseq
  %v557 = vshrl.u32 %v556, 7
  %v558 = vsub.s32 0, %v557
  %v559 = vrot.slane %v555, %v558
  %v560 = vlaneseq
  %v561 = vshrl.u32 %v560, 7
  %v562 = vsub.s32 1, %v561
  %v563 = vrot.slane %v555, %v562
  %v564 = vlaneseq
  %v565 = vshrl.u32 %v564, 7
  %v566 = vsub.s32 2, %v565
  %v567 = vrot.slane %v555, %v566
  %v568 = vlaneseq
  %v569 = vshrl.u32 %v568, 7
  %v570 = vsub.s32 3, %v569
  %v571 = vrot.slane %v555, %v570
  %vm572 = vcmp.eq.s32.totalorder %v559, 1
  %vm573 = vcmp.eq.s32.totalorder %v563, 1
  %vm574 = vcmp.eq.s32.totalorder %v567, 1
  %vm575 = vcmp.eq.s32.totalorder %v571, 1
  %v576 = vsel %vm572, %v553, 0.0
  %v577 = vsel %vm573, %v552, 0.0
  %v578 = vsel %vm574, %v551, 0.0
  %v579 = vsel %vm575, %v554, 0.0
  %580 = vset.pattern.permute.xlu0 7
  %581 = vperm.xlu0 %580, %v223
  %v582 = vpop.permute.xlu0 %581
  %v584 = vmul.f32 %v576, %v582
  %v585 = vmul.f32 %v577, %v582
  %v586 = vmul.f32 %v578, %v582
  %v587 = vmul.f32 %v579, %v582
  %v588 = vadd.f32 %v538, %v584
  %v589 = vadd.f32 %v539, %v585
  %v590 = vadd.f32 %v540, %v586
  %v591 = vadd.f32 %v541, %v587
  %vm592 = vmand %vm490, %vm338
  %593 = vrot.lane.b32.xlu0 %v217, 111
  %v594 = vpop.permute.xlu0 %593
  %595 = vrot.lane.b32.xlu0 %v218, 111
  %v596 = vpop.permute.xlu0 %595
  %597 = vrot.lane.b32.xlu0 %v219, 111
  %v598 = vpop.permute.xlu0 %597
  %599 = vrot.lane.b32.xlu0 %v220, 111
  %v600 = vpop.permute.xlu0 %599
  %vm601 = vcmp.lt.s32.totalorder %v245, 111
  %v602 = vsel %vm601, %v598, %v600
  %v603 = vsel %vm601, %v596, %v598
  %v604 = vsel %vm601, %v594, %v596
  %v605 = vsel %vm601, %v600, %v594
  %v606 = vsel %vm592, 1, 0
  %v607 = vlaneseq
  %v608 = vshrl.u32 %v607, 7
  %v609 = vsub.s32 0, %v608
  %v610 = vrot.slane %v606, %v609
  %v611 = vlaneseq
  %v612 = vshrl.u32 %v611, 7
  %v613 = vsub.s32 1, %v612
  %v614 = vrot.slane %v606, %v613
  %v615 = vlaneseq
  %v616 = vshrl.u32 %v615, 7
  %v617 = vsub.s32 2, %v616
  %v618 = vrot.slane %v606, %v617
  %v619 = vlaneseq
  %v620 = vshrl.u32 %v619, 7
  %v621 = vsub.s32 3, %v620
  %v622 = vrot.slane %v606, %v621
  %vm623 = vcmp.eq.s32.totalorder %v610, 1
  %vm624 = vcmp.eq.s32.totalorder %v614, 1
  %vm625 = vcmp.eq.s32.totalorder %v618, 1
  %vm626 = vcmp.eq.s32.totalorder %v622, 1
  %v627 = vsel %vm623, %v604, 0.0
  %v628 = vsel %vm624, %v603, 0.0
  %v629 = vsel %vm625, %v602, 0.0
  %v630 = vsel %vm626, %v605, 0.0
  %631 = vset.pattern.permute.xlu0 8
  %632 = vperm.xlu0 %631, %v223
  %v633 = vpop.permute.xlu0 %632
  %v635 = vmul.f32 %v627, %v633
  %v636 = vmul.f32 %v628, %v633
  %v637 = vmul.f32 %v629, %v633
  %v638 = vmul.f32 %v630, %v633
  %v639 = vadd.f32 %v588, %v635
  %v640 = vadd.f32 %v589, %v636
  %v641 = vadd.f32 %v590, %v637
  %v642 = vadd.f32 %v591, %v638
  %v643 = vld [vmem:[%s5] sm:$0xff]
  %645 = vset.pattern.permute.xlu0 0
  %646 = vperm.xlu0 %645, %v643
  %v647 = vpop.permute.xlu0 %646
  %v649 = vadd.f32 %v639, %v647
  %v650 = vadd.f32 %v640, %v647
  %v651 = vadd.f32 %v641, %v647
  %v652 = vadd.f32 %v642, %v647
  %v653 = vld [vmem:[%s6] sm:$0xff]
  %v654 = vld [vmem:[%s7] sm:$0xff]
  %656 = vset.pattern.permute.xlu0 0
  %657 = vperm.xlu0 %656, %v654
  %v658 = vpop.permute.xlu0 %657
  %vm660 = vcmask 64512
  %v662 = vsel %vm660, %v653, 0
  %664 = vmatprep.subr.mxu0 %v650
  %665 = vmatpush1.msra.mxu0 %v649
  %666 = vmatprep.subr.mxu0 0.0
  %667 = vmatpush1.msra.mxu0 0.0
  %668 = vmatprep.subr.mxu0 0.0
  %669 = vmatpush1.msra.mxu0 0.0
  %670 = vmatprep.subr.mxu0 0.0
  %671 = vmatpush1.msra.mxu0 0.0
  %672 = vmatprep.subr.mxu0 0.0
  %673 = vmatpush1.msra.mxu0 0.0
  %674 = vmatprep.subr.mxu0 0.0
  %675 = vmatpush1.msra.mxu0 0.0
  %676 = vmatprep.subr.mxu0 0.0
  %677 = vmatpush1.msra.mxu0 0.0
  %678 = vmatprep.subr.mxu0 0.0
  %679 = vmatpush1.msra.mxu0 0.0
  %680 = vmatprep.subr.mxu0 0.0
  %681 = vmatpush1.msra.mxu0 0.0
  %682 = vmatprep.subr.mxu0 0.0
  %683 = vmatpush1.msra.mxu0 0.0
  %684 = vmatprep.subr.mxu0 0.0
  %685 = vmatpush1.msra.mxu0 0.0
  %686 = vmatprep.subr.mxu0 0.0
  %687 = vmatpush1.msra.mxu0 0.0
  %688 = vmatprep.subr.mxu0 0.0
  %689 = vmatpush1.msra.mxu0 0.0
  %690 = vmatprep.subr.mxu0 0.0
  %691 = vmatpush1.msra.mxu0 0.0
  %692 = vmatprep.subr.mxu0 0.0
  %693 = vmatpush1.msra.mxu0 0.0
  %694 = vmatprep.subr.mxu0 0.0
  %695 = vmatpush1.msra.mxu0 0.0
  %696 = vmatprep.subr.mxu0 0.0
  %697 = vmatpush1.msra.mxu0 0.0
  %698 = vmatprep.subr.mxu0 0.0
  %699 = vmatpush1.msra.mxu0 0.0
  %700 = vmatprep.subr.mxu0 0.0
  %701 = vmatpush1.msra.mxu0 0.0
  %702 = vmatprep.subr.mxu0 0.0
  %703 = vmatpush1.msra.mxu0 0.0
  %704 = vmatprep.subr.mxu0 0.0
  %705 = vmatpush1.msra.mxu0 0.0
  %706 = vmatprep.subr.mxu0 0.0
  %707 = vmatpush1.msra.mxu0 0.0
  %708 = vmatprep.subr.mxu0 0.0
  %709 = vmatpush1.msra.mxu0 0.0
  %710 = vmatprep.subr.mxu0 0.0
  %711 = vmatpush1.msra.mxu0 0.0
  %712 = vmatprep.subr.mxu0 0.0
  %713 = vmatpush1.msra.mxu0 0.0
  %714 = vmatprep.subr.mxu0 0.0
  %715 = vmatpush1.msra.mxu0 0.0
  %716 = vmatprep.subr.mxu0 0.0
  %717 = vmatpush1.msra.mxu0 0.0
  %718 = vmatprep.subr.mxu0 0.0
  %719 = vmatpush1.msra.mxu0 0.0
  %720 = vmatprep.subr.mxu0 0.0
  %721 = vmatpush1.msra.mxu0 0.0
  %722 = vmatprep.subr.mxu0 0.0
  %723 = vmatpush1.msra.mxu0 0.0
  %724 = vmatprep.subr.mxu0 0.0
  %725 = vmatpush1.msra.mxu0 0.0
  %726 = vmatprep.subr.mxu0 0.0
  %727 = vmatpush1.msra.mxu0 0.0
  %728 = vmatprep.mubr.f32.mxu0 0.0
  %729 = vmatmul.mubr.f32.gmra.mrb[0].mxu0 %v662
  %v730 = vpop.f32.mrb[0].mxu0
  %v731 = vadd.f32 %v658, %v730
  %v732 = vpop.f32.mrb[0].mxu0
  %v733 = vadd.f32 %v658, %v732
  %734 = vdwg.mxu0
  %735 = vmatprep.subr.mxu0 %v652
  %736 = vmatpush1.msra.mxu0 %v651
  %737 = vmatprep.subr.mxu0 0.0
  %738 = vmatpush1.msra.mxu0 0.0
  %739 = vmatprep.subr.mxu0 0.0
  %740 = vmatpush1.msra.mxu0 0.0
  %741 = vmatprep.subr.mxu0 0.0
  %742 = vmatpush1.msra.mxu0 0.0
  %743 = vmatprep.subr.mxu0 0.0
  %744 = vmatpush1.msra.mxu0 0.0
  %745 = vmatprep.subr.mxu0 0.0
  %746 = vmatpush1.msra.mxu0 0.0
  %747 = vmatprep.subr.mxu0 0.0
  %748 = vmatpush1.msra.mxu0 0.0
  %749 = vmatprep.subr.mxu0 0.0
  %750 = vmatpush1.msra.mxu0 0.0
  %751 = vmatprep.subr.mxu0 0.0
  %752 = vmatpush1.msra.mxu0 0.0
  %753 = vmatprep.subr.mxu0 0.0
  %754 = vmatpush1.msra.mxu0 0.0
  %755 = vmatprep.subr.mxu0 0.0
  %756 = vmatpush1.msra.mxu0 0.0
  %757 = vmatprep.subr.mxu0 0.0
  %758 = vmatpush1.msra.mxu0 0.0
  %759 = vmatprep.subr.mxu0 0.0
  %760 = vmatpush1.msra.mxu0 0.0
  %761 = vmatprep.subr.mxu0 0.0
  %762 = vmatpush1.msra.mxu0 0.0
  %763 = vmatprep.subr.mxu0 0.0
  %764 = vmatpush1.msra.mxu0 0.0
  %765 = vmatprep.subr.mxu0 0.0
  %766 = vmatpush1.msra.mxu0 0.0
  %767 = vmatprep.subr.mxu0 0.0
  %768 = vmatpush1.msra.mxu0 0.0
  %769 = vmatprep.subr.mxu0 0.0
  %770 = vmatpush1.msra.mxu0 0.0
  %771 = vmatprep.subr.mxu0 0.0
  %772 = vmatpush1.msra.mxu0 0.0
  %773 = vmatprep.subr.mxu0 0.0
  %774 = vmatpush1.msra.mxu0 0.0
  %775 = vmatprep.subr.mxu0 0.0
  %776 = vmatpush1.msra.mxu0 0.0
  %777 = vmatprep.subr.mxu0 0.0
  %778 = vmatpush1.msra.mxu0 0.0
  %779 = vmatprep.subr.mxu0 0.0
  %780 = vmatpush1.msra.mxu0 0.0
  %781 = vmatprep.subr.mxu0 0.0
  %782 = vmatpush1.msra.mxu0 0.0
  %783 = vmatprep.subr.mxu0 0.0
  %784 = vmatpush1.msra.mxu0 0.0
  %785 = vmatprep.subr.mxu0 0.0
  %786 = vmatpush1.msra.mxu0 0.0
  %787 = vmatprep.subr.mxu0 0.0
  %788 = vmatpush1.msra.mxu0 0.0
  %789 = vmatprep.subr.mxu0 0.0
  %790 = vmatpush1.msra.mxu0 0.0
  %791 = vmatprep.subr.mxu0 0.0
  %792 = vmatpush1.msra.mxu0 0.0
  %793 = vmatprep.subr.mxu0 0.0
  %794 = vmatpush1.msra.mxu0 0.0
  %795 = vmatprep.subr.mxu0 0.0
  %796 = vmatpush1.msra.mxu0 0.0
  %797 = vmatprep.subr.mxu0 0.0
  %798 = vmatpush1.msra.mxu0 0.0
  %799 = vmatprep.mubr.f32.mxu0 0.0
  %800 = vmatmul.mubr.f32.gmra.mrb[0].mxu0 %v662
  %v801 = vpop.f32.mrb[0].mxu0
  %v802 = vadd.f32 %v658, %v801
  %v803 = vpop.f32.mrb[0].mxu0
  %v804 = vadd.f32 %v658, %v803
  %805 = vdwg.mxu0
  %806 = vst [vmem:[%s10] sm:$0xff] %v731
  %807 = vst [vmem:[%s10 + $0x8] sm:$0xff] %v733
  %808 = vst [vmem:[%s10 + $0x10] sm:$0xff] %v802
  %809 = vst [vmem:[%s10 + $0x18] sm:$0xff] %v804
  // Predicated region
  $region42: #{depth_conv_forward.1} parent=0 // pred_check
    _
  $region43: #{depth_conv_forward.1} parent=0 // pred_check_branch
    %811 = sbr.rel (0) target = $region45
  $region44: #{depth_conv_forward.1} parent=0 // pred_region
    _
  $region45: #{depth_conv_forward.1} parent=0 // pred_fallthru
    _
  // Predicated region
  $region46: #{depth_conv_forward.1} parent=0 // pred_check
    _
  $region47: #{depth_conv_forward.1} parent=0 // pred_check_branch
    %813 = sbr.rel (0) target = $region49
  $region48: #{depth_conv_forward.1} parent=0 // pred_region
    _
  $region49: #{depth_conv_forward.1} parent=0 // pred_fallthru
    _

</llo_original>
